<compile_context>
chip_gen: v7x
topology: tpu7x:2x2x1
jax: 0.10.0
libtpu: 0.0.40
codegen_flags: <defaults>
</compile_context>

<pallas_src>
import math

import jax
import jax.numpy as jnp
from jax import lax
from jax.experimental import pallas as pl
from jax.experimental.pallas import tpu as pltpu


def _get_hex_conv_mask(kernel_size: int) -> jnp.ndarray:
    """Same hex mask as the PyTorch reference."""
    mask = [[1.0] * kernel_size for _ in range(kernel_size)]
    cutoff = (kernel_size - 1) // 2
    for i in range(cutoff):
        for j in range(cutoff - i):
            mask[i][j] = 0.0
            mask[kernel_size - 1 - i][kernel_size - 1 - j] = 0.0
    return jnp.asarray(mask, dtype=jnp.float32)


def _round_up(x: int, m: int) -> int:
    return -(-x // m) * m


def _vmem_capacity_bytes() -> int:
    """Physical per-core VMEM; conservative 64 MiB (v7x) if the query fails."""
    cap = 64 * 1024 * 1024
    try:
        info = pltpu.get_tpu_info()
        cap = int(getattr(info, "vmem_capacity_bytes", cap)) or cap
    except Exception:
        pass
    return cap


def _pick_col_tile(OW, C_in, C_out, K, s, itemsize, weight_budget):
    """Largest output-column tile whose (double-buffered) banded weight fits."""
    def wbytes(owt):
        win = (owt - 1) * s + K
        kc = _round_up(win * C_in, 128)
        return 2 * K * kc * owt * C_out * itemsize
    # Full width is always legal; proper tiles need 128-aligned output lanes and
    # 128-aligned input-lane offsets between tiles (clean dynamic lane slices).
    cands = [OW] + [d for d in range(OW - 1, 0, -1)
                    if OW % d == 0
                    and (d * C_out) % 128 == 0
                    and (d * s * C_in) % 128 == 0]
    for owt in cands:
        if wbytes(owt) <= weight_budget:
            return owt
    return cands[-1]


def _pick_row_batch_tiles(N, OH, CW, fixed_bytes, x_bytes_per_image,
                          out_bytes_per_row, vmem_budget, m_cap=512):
    """Row tile TH (divides OH, mult. of 8 or == OH) and batch tile Nb (divides N).

    Score prefers >= 2 parallel grid steps (both v7x TensorCores busy), then the
    largest matmul M = Nb*TH (fills the 128/256-row MXU), within the VMEM budget.
    """
    th_cands = sorted({OH, *[d for d in range(8, OH + 1, 8) if OH % d == 0]},
                      reverse=True)
    nb_cands = [d for d in range(N, 0, -1) if N % d == 0]
    best = None
    for TH in th_cands:
        for Nb in nb_cands:
            m = Nb * TH
            if m > m_cap:
                continue
            need = (fixed_bytes + 2 * Nb * x_bytes_per_image
                    + 2 * Nb * TH * out_bytes_per_row)
            if need > vmem_budget:
                continue
            steps = (N // Nb) * (OH // TH) * CW
            score = (min(steps, 2), m)
            if best is None or score > best[0]:
                best = (score, TH, Nb)
    if best is None:                       # pathological fallback: smallest tiles
        return min(th_cands), 1
    return best[1], best[2]


def _make_kernel(K, stride, TH, Nb, Kc, lane_out, col_stride, CW):
    """Pallas kernel body for fixed static geometry."""

    def kernel(x_ref, w_ref, b_ref, o_ref):
        # x_ref: (Nb, stride, Hrows, XL)  phase-deinterleaved, lane-padded rows
        # w_ref: (K, Kc, lane_out)        banded masked filter for one col tile
        # b_ref: (1, lane_out)
        # o_ref: (Nb, TH, lane_out)
        t = pl.program_id(1)
        row_base = t * TH
        if TH % 8 == 0:
            row_base = pl.multiple_of(row_base, 8)
        if CW > 1:
            col0 = pl.multiple_of(pl.program_id(2) * col_stride, 128)

        acc = jnp.zeros((Nb * TH, lane_out), dtype=jnp.float32)
        for kh in range(K):                    # K is small (3/5/7): cheap unroll
            ph, dr = kh % stride, kh // stride
            if CW > 1:
                rows = x_ref[:, ph, pl.ds(row_base + dr, TH), pl.ds(col0, Kc)]
            else:
                rows = x_ref[:, ph, pl.ds(row_base + dr, TH), :]
            acc = acc + jnp.dot(rows.reshape(Nb * TH, Kc), w_ref[kh],
                                preferred_element_type=jnp.float32)
        acc = acc + b_ref[...]                 # (1, lane_out) broadcasts over rows
        o_ref[...] = acc.reshape(Nb, TH, lane_out).astype(o_ref.dtype)

    return kernel


def hex_conv_forward(x_nchw, filt, bias, *, stride: int, padding: int,
                     compute_dtype=jnp.float32):
    """HexConv forward.

    x_nchw: (N, C_in, H, W); filt: (C_out, C_in, K, K) (unmasked; mask applied here);
    bias: (C_out,) or None.  Returns (N, C_out, OH, OW).
    Note: compute_dtype=bf16 needs a looser tolerance than the f32 reference.
    """
    N, C_in, H, W = x_nchw.shape
    C_out, _, K, _ = filt.shape
    s = stride
    Hp, Wp = H + 2 * padding, W + 2 * padding
    OH = (Hp - K) // s + 1
    OW = (Wp - K) // s + 1
    assert OH > 0 and OW > 0

    itemsize = jnp.dtype(compute_dtype).itemsize
    out_itemsize = jnp.dtype(x_nchw.dtype).itemsize
    vmem_cap = _vmem_capacity_bytes()
    budget = (vmem_cap * 3) // 4          # leave headroom for compiler scratch

    # --- output-column tile geometry ----------------------------------------
    OWt = _pick_col_tile(OW, C_in, C_out, K, s, itemsize, budget // 3)
    CW = OW // OWt
    lane_out = OWt * C_out
    Win_t = (OWt - 1) * s + K                 # input columns per column tile
    Kc_raw = _round_up(Win_t * C_in, 128)     # padded per-tap contraction
    col_stride = OWt * s * C_in               # input-lane offset between tiles
    XL = _round_up((CW - 1) * col_stride + Kc_raw, 128)
    Kc = XL if CW == 1 else Kc_raw            # CW==1: kernel reads full lanes

    # --- activation prep: NCHW -> padded NHWC, lanes = (W, C_in), cast once --
    x = jnp.transpose(x_nchw, (0, 2, 3, 1))
    x = jnp.pad(x, ((0, 0), (padding, padding), (padding, padding), (0, 0)))
    keep = min(Wp * C_in, XL)
    x2 = x.reshape(N, Hp, Wp * C_in)[:, :, :keep]
    x2 = jnp.pad(x2, ((0, 0), (0, 0), (0, XL - keep)))
    # De-interleave rows by stride phase so every tap is a contiguous sublane load.
    Hrows = OH + (K - 1) // s
    H_ext = Hrows * s
    if H_ext <= Hp:
        x2 = x2[:, :H_ext, :]
    else:
        x2 = jnp.pad(x2, ((0, 0), (0, H_ext - Hp), (0, 0)))
    x_de = x2.reshape(N, Hrows, s, XL).transpose(0, 2, 1, 3)   # (N, s, Hrows, XL)
    x_de = x_de.astype(compute_dtype)

    # --- weights: hex mask + banded (block-Toeplitz) fold for ONE column tile --
    # B[kh, w*C_in + c, ow*C_out + co] = (mask*filter)[co, c, kh, w - ow*stride]
    mask = _get_hex_conv_mask(K)
    wm = (filt * mask[None, None, :, :]).astype(jnp.float32)       # (C_out,C_in,K,K)
    wt = jnp.transpose(wm, (2, 3, 1, 0))                           # (kh,kw,C_in,C_out)
    w_pos = jnp.arange(OWt)[None, :] * s + jnp.arange(K)[:, None]  # (K, OWt)
    onehot = (w_pos[:, :, None] == jnp.arange(Win_t)[None, None, :]).astype(jnp.float32)
    banded = jnp.einsum("hkcd,kow->hwcod", wt, onehot)             # (K,Win_t,C_in,OWt,C_out)
    banded = banded.reshape(K, Win_t * C_in, lane_out)
    banded = jnp.pad(banded, ((0, 0), (0, Kc - Win_t * C_in), (0, 0)))
    banded = banded.astype(compute_dtype)

    if bias is None:
        b_tiled = jnp.zeros((1, lane_out), dtype=jnp.float32)
    else:
        b_tiled = jnp.tile(bias.astype(jnp.float32), OWt).reshape(1, lane_out)

    # --- row / batch tiles from the VMEM budget ------------------------------
    fixed = 2 * K * Kc * lane_out * itemsize + 2 * lane_out * 4
    x_img = s * Hrows * XL * itemsize
    out_row = lane_out * out_itemsize
    TH, Nb = _pick_row_batch_tiles(N, OH, CW, fixed, x_img, out_row, budget)
    NB, T = N // Nb, OH // TH

    need = fixed + 2 * Nb * x_img + 2 * Nb * TH * out_row
    vmem_limit = int(min(vmem_cap, max(need + (8 << 20), 32 << 20)))

    kernel = _make_kernel(K, s, TH, Nb, Kc, lane_out, col_stride, CW)

    out_flat = pl.pallas_call(
        kernel,
        out_shape=jax.ShapeDtypeStruct((N, OH, OW * C_out), x_nchw.dtype),
        grid_spec=pltpu.PrefetchScalarGridSpec(
            num_scalar_prefetch=0,
            grid=(NB, T, CW),
            in_specs=[
                pl.BlockSpec((Nb, s, Hrows, XL), lambda nb, t, j: (nb, 0, 0, 0)),
                pl.BlockSpec((K, Kc, lane_out), lambda nb, t, j: (0, 0, 0)),
                pl.BlockSpec((1, lane_out), lambda nb, t, j: (0, 0)),
            ],
            out_specs=pl.BlockSpec((Nb, TH, lane_out), lambda nb, t, j: (nb, t, j)),
        ),
        compiler_params=pltpu.CompilerParams(
            dimension_semantics=("parallel", "parallel", "parallel"),
            vmem_limit_bytes=vmem_limit,
        ),
    )(x_de, banded, b_tiled)

    # (N, OH, OW*C_out) -> (N, C_out, OH, OW)
    out = out_flat.reshape(N, OH, OW, C_out)
    return jnp.transpose(out, (0, 3, 1, 2))


def _reference_conv(x_nchw, filt, bias, *, stride: int, padding: int):
    """Pure-JAX reference (lax conv) for correctness checking."""
    K = filt.shape[-1]
    masked = filt * _get_hex_conv_mask(K)[None, None, :, :]
    out = lax.conv_general_dilated(
        x_nchw, masked,
        window_strides=(stride, stride),
        padding=((padding, padding), (padding, padding)),
        dimension_numbers=("NCHW", "OIHW", "NCHW"),
    )
    if bias is not None:
        out = out + bias[None, :, None, None]
    return out


if __name__ == "__main__":
    # module hyperparameters
    in_channels, out_channels = 4, 8
    kernel_size, stride, padding = 3, 1, 1
    use_bias = False  # matches HexConv default

    # deterministic parameter init (mirrors kaiming_uniform_ with a=sqrt(5))
    key = jax.random.PRNGKey(0)
    k_filt, k_x, k_bias = jax.random.split(key, 3)
    fan_in = in_channels * kernel_size * kernel_size
    bound = 1.0 / math.sqrt(fan_in)
    filt = jax.random.uniform(
        k_filt, (out_channels, in_channels, kernel_size, kernel_size),
        minval=-bound, maxval=bound, dtype=jnp.float32)
    bias = None
    if use_bias:
        bias = jax.random.uniform(
            k_bias, (out_channels,), minval=-bound, maxval=bound, dtype=jnp.float32)

    # example input (NCHW)
    x = jax.random.normal(k_x, (2, in_channels, 16, 16), dtype=jnp.float32)

    out = hex_conv_forward(x, filt, bias, stride=stride, padding=padding)
    out = jax.block_until_ready(out)

    ref = _reference_conv(x, filt, bias, stride=stride, padding=padding)
    assert out.shape == ref.shape == (2, out_channels, 16, 16), out.shape
    assert jnp.allclose(out, ref, atol=1e-4, rtol=1e-4), "mismatch vs reference conv"

    print("KERNEL_OK")
</pallas_src>

<mosaic_0001>
module attributes {stable_mosaic.version = 11 : i64} {
  func.func @kernel(%arg0: i32, %arg1: i32, %arg2: i32, %arg3: memref<1x1x18x128xf32, #tpu.memory_space<vmem>>, %arg4: memref<3x128x128xf32, #tpu.memory_space<vmem>>, %arg5: memref<1x128xf32, #tpu.memory_space<vmem>>, %arg6: memref<1x16x128xf32, #tpu.memory_space<vmem>>) attributes {dimension_semantics = [#tpu.dimension_semantics<parallel>, #tpu.dimension_semantics<parallel>, #tpu.dimension_semantics<parallel>], iteration_bounds = array<i64: 2, 1, 1>, scalar_prefetch = 0 : i64, scratch_operands = 0 : i64, tpu.core_type = #tpu.core_type<tc>, window_params = [{transform_indices = @transform_0, window_bounds = array<i64: 1, 1, 18, 128>}, {pipeline_mode = #tpu.pipeline_mode<synchronous>, transform_indices = @transform_1, window_bounds = array<i64: 3, 128, 128>}, {pipeline_mode = #tpu.pipeline_mode<synchronous>, transform_indices = @transform_2, window_bounds = array<i64: 1, 128>}, {transform_indices = @transform_3, window_bounds = array<i64: 1, 16, 128>}]} {
    %c16_i32 = arith.constant 16 : i32
    %0 = arith.muli %arg1, %c16_i32 : i32
    %1 = tpu.assume_multiple %0, 8 : i32
    %cst = arith.constant 0.000000e+00 : f32
    %2 = vector.broadcast %cst : f32 to vector<16x128xf32>
    %c0_i32 = arith.constant 0 : i32
    %3 = arith.addi %1, %c0_i32 : i32
    %c0 = arith.constant 0 : index
    %c0_0 = arith.constant 0 : index
    %4 = arith.index_cast %3 : i32 to index
    %c0_1 = arith.constant 0 : index
    %5 = vector.load %arg3[%c0, %c0_0, %4, %c0_1] : memref<1x1x18x128xf32, #tpu.memory_space<vmem>>, vector<1x1x16x128xf32>
    %6 = vector.shape_cast %5 : vector<1x1x16x128xf32> to vector<1x16x128xf32>
    %7 = vector.shape_cast %6 : vector<1x16x128xf32> to vector<16x128xf32>
    %c0_2 = arith.constant 0 : index
    %c0_3 = arith.constant 0 : index
    %c0_4 = arith.constant 0 : index
    %8 = vector.load %arg4[%c0_2, %c0_3, %c0_4] : memref<3x128x128xf32, #tpu.memory_space<vmem>>, vector<1x128x128xf32>
    %9 = vector.shape_cast %8 : vector<1x128x128xf32> to vector<128x128xf32>
    %cst_5 = arith.constant dense<0.000000e+00> : vector<16x128xf32>
    %10 = tpu.matmul %7, %9, %cst_5 {dimension_numbers = #tpu.dot_dimension_numbers<[1], [0], [0], [1], [0, 0, 1, 1], [], []>} : vector<16x128xf32>, vector<128x128xf32>, vector<16x128xf32> -> vector<16x128xf32>
    %11 = arith.addf %2, %10 : vector<16x128xf32>
    %c1_i32 = arith.constant 1 : i32
    %12 = arith.addi %1, %c1_i32 : i32
    %c0_6 = arith.constant 0 : index
    %c0_7 = arith.constant 0 : index
    %13 = arith.index_cast %12 : i32 to index
    %c0_8 = arith.constant 0 : index
    %14 = vector.load %arg3[%c0_6, %c0_7, %13, %c0_8] : memref<1x1x18x128xf32, #tpu.memory_space<vmem>>, vector<1x1x16x128xf32>
    %15 = vector.shape_cast %14 : vector<1x1x16x128xf32> to vector<1x16x128xf32>
    %16 = vector.shape_cast %15 : vector<1x16x128xf32> to vector<16x128xf32>
    %c1 = arith.constant 1 : index
    %c0_9 = arith.constant 0 : index
    %c0_10 = arith.constant 0 : index
    %17 = vector.load %arg4[%c1, %c0_9, %c0_10] : memref<3x128x128xf32, #tpu.memory_space<vmem>>, vector<1x128x128xf32>
    %18 = vector.shape_cast %17 : vector<1x128x128xf32> to vector<128x128xf32>
    %cst_11 = arith.constant dense<0.000000e+00> : vector<16x128xf32>
    %19 = tpu.matmul %16, %18, %cst_11 {dimension_numbers = #tpu.dot_dimension_numbers<[1], [0], [0], [1], [0, 0, 1, 1], [], []>} : vector<16x128xf32>, vector<128x128xf32>, vector<16x128xf32> -> vector<16x128xf32>
    %20 = arith.addf %11, %19 : vector<16x128xf32>
    %c2_i32 = arith.constant 2 : i32
    %21 = arith.addi %1, %c2_i32 : i32
    %c0_12 = arith.constant 0 : index
    %c0_13 = arith.constant 0 : index
    %22 = arith.index_cast %21 : i32 to index
    %c0_14 = arith.constant 0 : index
    %23 = vector.load %arg3[%c0_12, %c0_13, %22, %c0_14] : memref<1x1x18x128xf32, #tpu.memory_space<vmem>>, vector<1x1x16x128xf32>
    %24 = vector.shape_cast %23 : vector<1x1x16x128xf32> to vector<1x16x128xf32>
    %25 = vector.shape_cast %24 : vector<1x16x128xf32> to vector<16x128xf32>
    %c2 = arith.constant 2 : index
    %c0_15 = arith.constant 0 : index
    %c0_16 = arith.constant 0 : index
    %26 = vector.load %arg4[%c2, %c0_15, %c0_16] : memref<3x128x128xf32, #tpu.memory_space<vmem>>, vector<1x128x128xf32>
    %27 = vector.shape_cast %26 : vector<1x128x128xf32> to vector<128x128xf32>
    %cst_17 = arith.constant dense<0.000000e+00> : vector<16x128xf32>
    %28 = tpu.matmul %25, %27, %cst_17 {dimension_numbers = #tpu.dot_dimension_numbers<[1], [0], [0], [1], [0, 0, 1, 1], [], []>} : vector<16x128xf32>, vector<128x128xf32>, vector<16x128xf32> -> vector<16x128xf32>
    %29 = arith.addf %20, %28 : vector<16x128xf32>
    %c0_18 = arith.constant 0 : index
    %c0_19 = arith.constant 0 : index
    %30 = vector.load %arg5[%c0_18, %c0_19] : memref<1x128xf32, #tpu.memory_space<vmem>>, vector<1x128xf32>
    %31 = vector.broadcast %30 : vector<1x128xf32> to vector<16x128xf32>
    %32 = arith.addf %29, %31 : vector<16x128xf32>
    %33 = vector.shape_cast %32 : vector<16x128xf32> to vector<1x16x128xf32>
    %c0_20 = arith.constant 0 : index
    %c0_21 = arith.constant 0 : index
    %c0_22 = arith.constant 0 : index
    %34 = vector.load %arg6[%c0_20, %c0_21, %c0_22] : memref<1x16x128xf32, #tpu.memory_space<vmem>>, vector<1x16x128xf32>
    tpu.vector_store %arg6[%c0_20, %c0_21, %c0_22], %33 {strides = array<i32>} : memref<1x16x128xf32, #tpu.memory_space<vmem>>, vector<1x16x128xf32>,
    return
  }
  func.func @transform_0(%arg0: i32, %arg1: i32, %arg2: i32) -> (i32, i32, i32, i32) {
    %c0_i32 = arith.constant 0 : i32
    %c0_i32_0 = arith.constant 0 : i32
    %c0_i32_1 = arith.constant 0 : i32
    %c0_i32_2 = arith.constant 0 : i32
    return %arg0, %c0_i32, %c0_i32_0, %c0_i32_1 : i32, i32, i32, i32
  }
  func.func @transform_1(%arg0: i32, %arg1: i32, %arg2: i32) -> (i32, i32, i32) {
    %c0_i32 = arith.constant 0 : i32
    %c0_i32_0 = arith.constant 0 : i32
    %c0_i32_1 = arith.constant 0 : i32
    %c0_i32_2 = arith.constant 0 : i32
    return %c0_i32, %c0_i32_0, %c0_i32_1 : i32, i32, i32
  }
  func.func @transform_2(%arg0: i32, %arg1: i32, %arg2: i32) -> (i32, i32) {
    %c0_i32 = arith.constant 0 : i32
    %c0_i32_0 = arith.constant 0 : i32
    %c0_i32_1 = arith.constant 0 : i32
    return %c0_i32, %c0_i32_0 : i32, i32
  }
  func.func @transform_3(%arg0: i32, %arg1: i32, %arg2: i32) -> (i32, i32, i32) {
    %c0_i32 = arith.constant 0 : i32
    return %arg0, %arg1, %arg2 : i32, i32, i32
  }
}

</mosaic_0001>

<llo_original>
// kernel: tpu_custom_call.1
$region0: #{tpu_custom_call.1}
  #allocation0 [shape = 'u32[]', space=smem, size = 0x4, offset = 0x4, fixed_abs, tag = 'smem constant byte address 0x4 - core index']
  #allocation1 [shape = 'u32[144,128]{1,0:T(1,128)}', space=vmem, size = 0x12000, scoped, tag = 'internal scratch']
  %s0 = inlined_call_operand.vmem [shape: f32[2,1,18,128], index: 0, kind: input, shape index: {}]
  %s1 = inlined_call_operand.hbm [shape: f32[3,128,128], index: 1, kind: input, shape index: {}]
  %s2 = inlined_call_operand.vmem [shape: f32[1,128], index: 2, kind: input, shape index: {}]
  %s3 = inlined_call_operand.hbm [shape: f32[2,16,128], index: 3, kind: output, shape index: {}]
  %s4 = sld [smem:[#allocation0]]
  $region49: #{tpu_custom_call.1} parent=0
    _
  %s6 = ssub.s32 1, %s4
  %s7 = scalar_select 0, %s6, %s4
  $region1: #{tpu_custom_call.1} parent=0
    #allocation2 [shape = 'u8[196608]{0}', space=vmem, size = 0x30000, scoped, tag = 'input window, operand 1, single buffered']
    #allocation3 [shape = 's32[2]{0}', space=sflag, size = 0x8, scoped, tag = 'scoped memory for tpu_custom_call.1']
    #allocation4 [shape = 's32[2]{0}', space=sflag, size = 0x8, scoped, tag = 'scoped memory for tpu_custom_call.1']
    #allocation5 [shape = 'u8[16384]{0}', space=vmem, size = 0x4000, scoped, tag = 'output window, operand 0']
    %8 = vsyncpa [#allocation3], 0
    %9 = vsyncpa [#allocation4], 0
    %s10 = scalar_lea.sflag [#allocation4], 1
    %11 = vsyncpa %s10, 0
    loop: start=0, step=1, limit=4
    $region2: #{tpu_custom_call.1} parent=1 // loop_pre_header
      _
    $region3: #{tpu_custom_call.1} parent=1 // loop_header
      %s13 = sphi 0, %s17
      %p14 = scmp.ge.s32.totalorder %s13, 4
      %s20 = sphi 0, %s39
      %s21 = sphi 0, %s35
      %s22 = sphi 0, %s31
      %s23 = sphi 0, %s20
      %s24 = sphi 0, %s21
      %s25 = sphi 0, %s22
      %s26 = sphi 0, %s23
      %s27 = sphi 0, %s24
      %s28 = sphi 0, %s25
      %s42 = sphi 0, %s44
      %s45 = sphi 0, %s42
      %s46 = sphi 0, %s45
      %s62 = sphi 0, %s46
      %s66 = sphi 0, %s66
      %s68 = sphi 0, %s66
      %s69 = sphi 0, %s68
      %s83 = sphi 0, %s69
      %s87 = sphi 0, %s87
      %s89 = sphi 0, %s87
      %s90 = sphi 0, %s89
      %s104 = sphi 0, %s90
      %s114 = sphi 0, %s116
      %s117 = sphi 0, %s114
      %s118 = sphi 0, %s117
      %s134 = sphi 0, %s118
    $region4: #{tpu_custom_call.1} parent=1 // loop_header_branch
      %16 = sbr.rel (%p14) target = $region8
    $region5: #{tpu_custom_call.1} parent=1 // loop_body
      %s18 = ssub.s32 %s13, 1
      %s19 = ssub.s32 %s13, 2
      %s29 = sadd.s32 1, %s22
      %p30 = scmp.ge.s32.totalorder %s29, 1
      %s31 = scalar_select %p30, 0, %s29
      %s32 = sadd.s32 1, %s21
      %s33 = scalar_select %p30, %s32, %s21
      %p34 = scmp.ge.s32.totalorder %s33, 1
      %s35 = scalar_select %p34, 0, %s33
      %s36 = sadd.s32 1, %s20
      %s37 = scalar_select %p34, %s36, %s20
      %p38 = scmp.ge.s32.totalorder %s37, 2
      %s39 = scalar_select %p38, 0, %s37
      %s40 = ssub.s32 %s20, %s39
      %p41 = scmp.eq.s32.totalorder %s40, 0
      %s43 = sadd.s32 %s42, 1
      %s44 = scalar_select %p41, %s42, %s43
      %p47 = pneg %p41
      %p48 = scmp.eq.s32.totalorder %s13, 1
      %p49 = por %p47, %p48
      %p50 = scmp.ne.s32.totalorder %s42, %s45
      %p51 = scmp.eq.s32.totalorder %s13, 0
      %p52 = por %p50, %p51
      %p53 = scmp.ne.s32.totalorder %s42, %s45
      %p54 = scmp.eq.s32.totalorder %s18, 1
      %p55 = por %p53, %p54
      %p56 = scmp.ne.s32.totalorder %s45, %s46
      %p57 = scmp.eq.s32.totalorder %s18, 0
      %p58 = por %p56, %p57
      %p59 = scmp.ne.s32.totalorder %s45, %s46
      %p60 = scmp.eq.s32.totalorder %s19, 1
      %p61 = por %p59, %p60
      %p63 = scmp.ne.s32.totalorder %s46, %s62
      %p64 = scmp.eq.s32.totalorder %s19, 0
      %p65 = por %p63, %p64
      %s67 = sadd.s32 %s66, 1
      %p70 = scmp.eq.s32.totalorder %s13, 1
      %p71 = scmp.ne.s32.totalorder %s66, %s68
      %p72 = scmp.eq.s32.totalorder %s13, 0
      %p73 = por %p71, %p72
      %p74 = scmp.ne.s32.totalorder %s66, %s68
      %p75 = scmp.eq.s32.totalorder %s18, 1
      %p76 = por %p74, %p75
      %p77 = scmp.ne.s32.totalorder %s68, %s69
      %p78 = scmp.eq.s32.totalorder %s18, 0
      %p79 = por %p77, %p78
      %p80 = scmp.ne.s32.totalorder %s68, %s69
      %p81 = scmp.eq.s32.totalorder %s19, 1
      %p82 = por %p80, %p81
      %p84 = scmp.ne.s32.totalorder %s69, %s83
      %p85 = scmp.eq.s32.totalorder %s19, 0
      %p86 = por %p84, %p85
      %s88 = sadd.s32 %s87, 1
      %p91 = scmp.eq.s32.totalorder %s13, 1
      %p92 = scmp.ne.s32.totalorder %s87, %s89
      %p93 = scmp.eq.s32.totalorder %s13, 0
      %p94 = por %p92, %p93
      %p95 = scmp.ne.s32.totalorder %s87, %s89
      %p96 = scmp.eq.s32.totalorder %s18, 1
      %p97 = por %p95, %p96
      %p98 = scmp.ne.s32.totalorder %s89, %s90
      %p99 = scmp.eq.s32.totalorder %s18, 0
      %p100 = por %p98, %p99
      %p101 = scmp.ne.s32.totalorder %s89, %s90
      %p102 = scmp.eq.s32.totalorder %s19, 1
      %p103 = por %p101, %p102
      %p105 = scmp.ne.s32.totalorder %s90, %s104
      %p106 = scmp.eq.s32.totalorder %s19, 0
      %p107 = por %p105, %p106
      %s108 = ssub.s32 %s20, %s39
      %s109 = ssub.s32 %s21, %s35
      %s110 = sor.u32 %s108, %s109
      %s111 = ssub.s32 %s22, %s31
      %s112 = sor.u32 %s110, %s111
      %p113 = scmp.eq.s32.totalorder %s112, 0
      %s115 = sadd.s32 %s114, 1
      %s116 = scalar_select %p113, %s114, %s115
      %p119 = pneg %p113
      %p120 = scmp.eq.s32.totalorder %s13, 1
      %p121 = por %p119, %p120
      %p122 = scmp.ne.s32.totalorder %s114, %s117
      %p123 = scmp.eq.s32.totalorder %s13, 0
      %p124 = por %p122, %p123
      %p125 = scmp.ne.s32.totalorder %s114, %s117
      %p126 = scmp.eq.s32.totalorder %s18, 1
      %p127 = por %p125, %p126
      %p128 = scmp.ne.s32.totalorder %s117, %s118
      %p129 = scmp.eq.s32.totalorder %s18, 0
      %p130 = por %p128, %p129
      %p131 = scmp.ne.s32.totalorder %s117, %s118
      %p132 = scmp.eq.s32.totalorder %s19, 1
      %p133 = por %p131, %p132
      %p135 = scmp.ne.s32.totalorder %s118, %s134
      %p136 = scmp.eq.s32.totalorder %s19, 0
      %p137 = por %p135, %p136
      %p138 = scmp.le.s32.totalorder 1, %s13
      %p139 = scmp.lt.s32.totalorder %s13, 3
      %p140 = pnand %p138, %p139
      %p141 = pneg %p140
      // Predicated region
      $region9: #{tpu_custom_call.1} parent=5 // pred_check
        _
      $region10: #{tpu_custom_call.1} parent=5 // pred_check_branch
        %143 = sbr.rel (%p140) target = $region12
      $region11: #{tpu_custom_call.1} parent=5 // pred_region
        %s144 = ssub.s32 %s13, 1
        // Predicated region
        $region13: #{tpu_custom_call.1} parent=11 // pred_check
          %p145 = pneg %p79
        $region14: #{tpu_custom_call.1} parent=11 // pred_check_branch
          %147 = sbr.rel (%p145) target = $region16
        $region15: #{tpu_custom_call.1} parent=11 // pred_region
          %s149 = ssub.s32 6144, 6144
          %150 = vsyncadd [#allocation3], %s149
          %s151 = sshll.u32 [#allocation2], 4
          %s152 = int_to_ptr.vmem [resolvable:$true] %s151
          %157 = dma.hbm_to_vmem [thread:$0]  %s1, 6144, %s152, [#allocation3], 128, 128, 8
        $region16: #{tpu_custom_call.1} parent=11 // pred_fallthru
          _
        // Predicated region
        $region17: #{tpu_custom_call.1} parent=11 // pred_check
          %p158 = pneg %p100
        $region18: #{tpu_custom_call.1} parent=11 // pred_check_branch
          %160 = sbr.rel (%p158) target = $region20
        $region19: #{tpu_custom_call.1} parent=11 // pred_region
          _
        $region20: #{tpu_custom_call.1} parent=11 // pred_fallthru
          _
      $region12: #{tpu_custom_call.1} parent=5 // pred_fallthru
        _
      %p161 = scmp.lt.s32.totalorder %s13, 2
      // Predicated region
      $region21: #{tpu_custom_call.1} parent=5 // pred_check
        %p162 = pneg %p161
      $region22: #{tpu_custom_call.1} parent=5 // pred_check_branch
        %164 = sbr.rel (%p162) target = $region24
      $region23: #{tpu_custom_call.1} parent=5 // pred_region
        // Predicated region
        $region25: #{tpu_custom_call.1} parent=23 // pred_check
          %p165 = pneg %p52
        $region26: #{tpu_custom_call.1} parent=23 // pred_check_branch
          %167 = sbr.rel (%p165) target = $region28
        $region27: #{tpu_custom_call.1} parent=23 // pred_region
          %p168 = scmp.lt.s32.totalorder %s20, 1
          %s169 = scalar_select %p168, %s20, 1
          %s170 = smul.addr %s169, 3
          %s171 = smul.addr %s170, 8
          %s172 = scalar_lea.vmem %s0, %s171
        $region28: #{tpu_custom_call.1} parent=23 // pred_fallthru
          _
      $region24: #{tpu_custom_call.1} parent=5 // pred_fallthru
        _
      %p173 = scmp.le.s32.totalorder 1, %s13
      %p174 = scmp.lt.s32.totalorder %s13, 3
      %p175 = pnand %p173, %p174
      %p176 = pneg %p175
      // Predicated region
      $region29: #{tpu_custom_call.1} parent=5 // pred_check
        _
      $region30: #{tpu_custom_call.1} parent=5 // pred_check_branch
        %178 = sbr.rel (%p175) target = $region32
      $region31: #{tpu_custom_call.1} parent=5 // pred_region
        %s179 = ssub.s32 %s13, 1
        // Predicated region
        $region33: #{tpu_custom_call.1} parent=31 // pred_check
          %p180 = pneg %p79
        $region34: #{tpu_custom_call.1} parent=31 // pred_check_branch
          %182 = sbr.rel (%p180) target = $region36
        $region35: #{tpu_custom_call.1} parent=31 // pred_region
          %183 = dma.done [#allocation3], 6144
        $region36: #{tpu_custom_call.1} parent=31 // pred_fallthru
          _
        %p184 = scmp.lt.s32.totalorder %s23, 1
        %s185 = scalar_select %p184, %s23, 1
        %s186 = smul.addr %s185, 3
        %s187 = smul.addr %s186, 8
        %s188 = scalar_lea.vmem %s0, %s187
        %p189 = pneg %p58
        %p190 = pneg %p55
        %p191 = pneg %p79
        %p192 = pneg %p76
        %p193 = pneg %p100
        %p194 = pneg %p97
        %p195 = pneg %p130
        %p196 = pneg %p127
        %s197 = sand.u32 %s117, 1
        %s198 = scalar_lea.sflag [#allocation4], %s197
        %s199 = sand.u32 %s117, 1
        %s200 = smul.addr %s199, 16
        %s201 = scalar_lea.vmem [#allocation5], %s200
        %p202 = scmp.lt.s32.totalorder %s23, 1
        %s203 = scalar_select %p202, %s23, 1
        %s204 = smul.addr %s203, 3
        %s205 = smul.addr %s204, 8
        %s206 = scalar_lea.vmem %s0, %s205
        %s207 = smul.u32 2, %s24
        %s208 = smul.u32 %s24, 16
        %s209 = scalar_lea.vmem %s206, %s208
        %v210 = vld [vmem:[%s209] sm:$0xff]
        %v211 = vld [vmem:[%s209 + $0x8] sm:$0xff]
        %v212 = vld [vmem:[#allocation2] sm:$0xff]
        %v213 = vld [vmem:[#allocation2 + $0x8] sm:$0xff]
        %v214 = vld [vmem:[#allocation2 + $0x10] sm:$0xff]
        %v215 = vld [vmem:[#allocation2 + $0x18] sm:$0xff]
        %v216 = vld [vmem:[#allocation2 + $0x20] sm:$0xff]
        %v217 = vld [vmem:[#allocation2 + $0x28] sm:$0xff]
        %v218 = vld [vmem:[#allocation2 + $0x30] sm:$0xff]
        %v219 = vld [vmem:[#allocation2 + $0x38] sm:$0xff]
        %v220 = vld [vmem:[#allocation2 + $0x40] sm:$0xff]
        %v221 = vld [vmem:[#allocation2 + $0x48] sm:$0xff]
        %v222 = vld [vmem:[#allocation2 + $0x50] sm:$0xff]
        %v223 = vld [vmem:[#allocation2 + $0x58] sm:$0xff]
        %v224 = vld [vmem:[#allocation2 + $0x60] sm:$0xff]
        %v225 = vld [vmem:[#allocation2 + $0x68] sm:$0xff]
        %v226 = vld [vmem:[#allocation2 + $0x70] sm:$0xff]
        %v227 = vld [vmem:[#allocation2 + $0x78] sm:$0xff]
        %s228 = sadd.s32 %s208, 1
        %s229 = scalar_lea.vmem %s206, %s228
        %v230 = vld [vmem:[%s229] sm:$0xff]
        %v231 = vld [vmem:[%s229 + $0x8] sm:$0xff]
        %s232 = scalar_lea.vmem [#allocation2], 128
        %v233 = vld [vmem:[%s232] sm:$0xff]
        %v234 = vld [vmem:[%s232 + $0x8] sm:$0xff]
        %v235 = vld [vmem:[%s232 + $0x10] sm:$0xff]
        %v236 = vld [vmem:[%s232 + $0x18] sm:$0xff]
        %v237 = vld [vmem:[%s232 + $0x20] sm:$0xff]
        %v238 = vld [vmem:[%s232 + $0x28] sm:$0xff]
        %v239 = vld [vmem:[%s232 + $0x30] sm:$0xff]
        %v240 = vld [vmem:[%s232 + $0x38] sm:$0xff]
        %v241 = vld [vmem:[%s232 + $0x40] sm:$0xff]
        %v242 = vld [vmem:[%s232 + $0x48] sm:$0xff]
        %v243 = vld [vmem:[%s232 + $0x50] sm:$0xff]
        %v244 = vld [vmem:[%s232 + $0x58] sm:$0xff]
        %v245 = vld [vmem:[%s232 + $0x60] sm:$0xff]
        %v246 = vld [vmem:[%s232 + $0x68] sm:$0xff]
        %v247 = vld [vmem:[%s232 + $0x70] sm:$0xff]
        %v248 = vld [vmem:[%s232 + $0x78] sm:$0xff]
        %249 = vmatprep.subr.mxu0 0.0
        %250 = vmatpush1.msra.mxu0 %v233
        %251 = vmatprep.subr.mxu0 0.0
        %252 = vmatpush1.msra.mxu0 %v234
        %253 = vmatprep.subr.mxu0 0.0
        %254 = vmatpush1.msra.mxu0 %v235
        %255 = vmatprep.subr.mxu0 0.0
        %256 = vmatpush1.msra.mxu0 %v236
        %257 = vmatprep.subr.mxu0 0.0
        %258 = vmatpush1.msra.mxu0 %v237
        %259 = vmatprep.subr.mxu0 0.0
        %260 = vmatpush1.msra.mxu0 %v238
        %261 = vmatprep.subr.mxu0 0.0
        %262 = vmatpush1.msra.mxu0 %v239
        %263 = vmatprep.subr.mxu0 0.0
        %264 = vmatpush1.msra.mxu0 %v240
        %265 = vmatprep.subr.mxu0 0.0
        %266 = vmatpush1.msra.mxu0 %v241
        %267 = vmatprep.subr.mxu0 0.0
        %268 = vmatpush1.msra.mxu0 %v242
        %269 = vmatprep.subr.mxu0 0.0
        %270 = vmatpush1.msra.mxu0 %v243
        %271 = vmatprep.subr.mxu0 0.0
        %272 = vmatpush1.msra.mxu0 %v244
        %273 = vmatprep.subr.mxu0 0.0
        %274 = vmatpush1.msra.mxu0 %v245
        %275 = vmatprep.subr.mxu0 0.0
        %276 = vmatpush1.msra.mxu0 %v246
        %277 = vmatprep.subr.mxu0 0.0
        %278 = vmatpush1.msra.mxu0 %v247
        %279 = vmatprep.subr.mxu0 0.0
        %280 = vmatpush1.msra.mxu0 %v248
        %281 = vmatprep.subr.mxu0 0.0
        %282 = vmatpush1.msra.mxu0 0.0
        %283 = vmatprep.subr.mxu0 0.0
        %284 = vmatpush1.msra.mxu0 0.0
        %285 = vmatprep.subr.mxu0 0.0
        %286 = vmatpush1.msra.mxu0 0.0
        %287 = vmatprep.subr.mxu0 0.0
        %288 = vmatpush1.msra.mxu0 0.0
        %289 = vmatprep.subr.mxu0 0.0
        %290 = vmatpush1.msra.mxu0 0.0
        %291 = vmatprep.subr.mxu0 0.0
        %292 = vmatpush1.msra.mxu0 0.0
        %293 = vmatprep.subr.mxu0 0.0
        %294 = vmatpush1.msra.mxu0 0.0
        %295 = vmatprep.subr.mxu0 0.0
        %296 = vmatpush1.msra.mxu0 0.0
        %297 = vmatprep.subr.mxu0 0.0
        %298 = vmatpush1.msra.mxu0 0.0
        %299 = vmatprep.subr.mxu0 0.0
        %300 = vmatpush1.msra.mxu0 0.0
        %301 = vmatprep.subr.mxu0 0.0
        %302 = vmatpush1.msra.mxu0 0.0
        %303 = vmatprep.subr.mxu0 0.0
        %304 = vmatpush1.msra.mxu0 0.0
        %305 = vmatprep.subr.mxu0 0.0
        %306 = vmatpush1.msra.mxu0 0.0
        %307 = vmatprep.subr.mxu0 0.0
        %308 = vmatpush1.msra.mxu0 0.0
        %309 = vmatprep.subr.mxu0 0.0
        %310 = vmatpush1.msra.mxu0 0.0
        %311 = vmatprep.subr.mxu0 0.0
        %312 = vmatpush1.msra.mxu0 0.0
        %313 = vmatprep.mubr.f32.mxu0 0.0
        %314 = vmatmul.mubr.f32.gmra.mrb[0].mxu0 %v230
        %v315 = vpop.f32.mrb[0].mxu0
        %v316 = vadd.f32 0.0, %v315
        %v317 = vpop.f32.mrb[0].mxu0
        %318 = vmatprep.mubr.f32.mxu0 0.0
        %319 = vmatmul.mubr.f32.gmra.mrb[0].mxu0 %v231
        %v320 = vpop.f32.mrb[0].mxu0
        %v321 = vadd.f32 0.0, %v320
        %v322 = vpop.f32.mrb[0].mxu0
        %323 = vdwg.mxu0
        %324 = vmatprep.subr.mxu0 0.0
        %325 = vmatpush1.msra.mxu0 %v212
        %326 = vmatprep.subr.mxu0 0.0
        %327 = vmatpush1.msra.mxu0 %v213
        %328 = vmatprep.subr.mxu0 0.0
        %329 = vmatpush1.msra.mxu0 %v214
        %330 = vmatprep.subr.mxu0 0.0
        %331 = vmatpush1.msra.mxu0 %v215
        %332 = vmatprep.subr.mxu0 0.0
        %333 = vmatpush1.msra.mxu0 %v216
        %334 = vmatprep.subr.mxu0 0.0
        %335 = vmatpush1.msra.mxu0 %v217
        %336 = vmatprep.subr.mxu0 0.0
        %337 = vmatpush1.msra.mxu0 %v218
        %338 = vmatprep.subr.mxu0 0.0
        %339 = vmatpush1.msra.mxu0 %v219
        %340 = vmatprep.subr.mxu0 0.0
        %341 = vmatpush1.msra.mxu0 %v220
        %342 = vmatprep.subr.mxu0 0.0
        %343 = vmatpush1.msra.mxu0 %v221
        %344 = vmatprep.subr.mxu0 0.0
        %345 = vmatpush1.msra.mxu0 %v222
        %346 = vmatprep.subr.mxu0 0.0
        %347 = vmatpush1.msra.mxu0 %v223
        %348 = vmatprep.subr.mxu0 0.0
        %349 = vmatpush1.msra.mxu0 %v224
        %350 = vmatprep.subr.mxu0 0.0
        %351 = vmatpush1.msra.mxu0 %v225
        %352 = vmatprep.subr.mxu0 0.0
        %353 = vmatpush1.msra.mxu0 %v226
        %354 = vmatprep.subr.mxu0 0.0
        %355 = vmatpush1.msra.mxu0 %v227
        %356 = vmatprep.subr.mxu0 0.0
        %357 = vmatpush1.msra.mxu0 0.0
        %358 = vmatprep.subr.mxu0 0.0
        %359 = vmatpush1.msra.mxu0 0.0
        %360 = vmatprep.subr.mxu0 0.0
        %361 = vmatpush1.msra.mxu0 0.0
        %362 = vmatprep.subr.mxu0 0.0
        %363 = vmatpush1.msra.mxu0 0.0
        %364 = vmatprep.subr.mxu0 0.0
        %365 = vmatpush1.msra.mxu0 0.0
        %366 = vmatprep.subr.mxu0 0.0
        %367 = vmatpush1.msra.mxu0 0.0
        %368 = vmatprep.subr.mxu0 0.0
        %369 = vmatpush1.msra.mxu0 0.0
        %370 = vmatprep.subr.mxu0 0.0
        %371 = vmatpush1.msra.mxu0 0.0
        %372 = vmatprep.subr.mxu0 0.0
        %373 = vmatpush1.msra.mxu0 0.0
        %374 = vmatprep.subr.mxu0 0.0
        %375 = vmatpush1.msra.mxu0 0.0
        %376 = vmatprep.subr.mxu0 0.0
        %377 = vmatpush1.msra.mxu0 0.0
        %378 = vmatprep.subr.mxu0 0.0
        %379 = vmatpush1.msra.mxu0 0.0
        %380 = vmatprep.subr.mxu0 0.0
        %381 = vmatpush1.msra.mxu0 0.0
        %382 = vmatprep.subr.mxu0 0.0
        %383 = vmatpush1.msra.mxu0 0.0
        %384 = vmatprep.subr.mxu0 0.0
        %385 = vmatpush1.msra.mxu0 0.0
        %386 = vmatprep.subr.mxu0 0.0
        %387 = vmatpush1.msra.mxu0 0.0
        %388 = vmatprep.mubr.f32.mxu0 0.0
        %389 = vmatmul.mubr.f32.gmra.mrb[0].mxu0 %v210
        %v390 = vpop.f32.mrb[0].mxu0
        %v391 = vadd.f32 %v316, %v390
        %v392 = vpop.f32.mrb[0].mxu0
        %393 = vmatprep.mubr.f32.mxu0 0.0
        %394 = vmatmul.mubr.f32.gmra.mrb[0].mxu0 %v211
        %v395 = vpop.f32.mrb[0].mxu0
        %v396 = vadd.f32 %v321, %v395
        %v397 = vpop.f32.mrb[0].mxu0
        %398 = vdwg.mxu0
        %s399 = sadd.s32 %s208, 2
        %s400 = scalar_lea.vmem %s206, %s399
        %v401 = vld [vmem:[%s400] sm:$0xff]
        %v402 = vld [vmem:[%s400 + $0x8] sm:$0xff]
        %s403 = scalar_lea.vmem [#allocation2], 256
        %v404 = vld [vmem:[%s403] sm:$0xff]
        %v405 = vld [vmem:[%s403 + $0x8] sm:$0xff]
        %v406 = vld [vmem:[%s403 + $0x10] sm:$0xff]
        %v407 = vld [vmem:[%s403 + $0x18] sm:$0xff]
        %v408 = vld [vmem:[%s403 + $0x20] sm:$0xff]
        %v409 = vld [vmem:[%s403 + $0x28] sm:$0xff]
        %v410 = vld [vmem:[%s403 + $0x30] sm:$0xff]
        %v411 = vld [vmem:[%s403 + $0x38] sm:$0xff]
        %v412 = vld [vmem:[%s403 + $0x40] sm:$0xff]
        %v413 = vld [vmem:[%s403 + $0x48] sm:$0xff]
        %v414 = vld [vmem:[%s403 + $0x50] sm:$0xff]
        %v415 = vld [vmem:[%s403 + $0x58] sm:$0xff]
        %v416 = vld [vmem:[%s403 + $0x60] sm:$0xff]
        %v417 = vld [vmem:[%s403 + $0x68] sm:$0xff]
        %v418 = vld [vmem:[%s403 + $0x70] sm:$0xff]
        %v419 = vld [vmem:[%s403 + $0x78] sm:$0xff]
        %420 = vmatprep.subr.mxu0 0.0
        %421 = vmatpush1.msra.mxu0 %v404
        %422 = vmatprep.subr.mxu0 0.0
        %423 = vmatpush1.msra.mxu0 %v405
        %424 = vmatprep.subr.mxu0 0.0
        %425 = vmatpush1.msra.mxu0 %v406
        %426 = vmatprep.subr.mxu0 0.0
        %427 = vmatpush1.msra.mxu0 %v407
        %428 = vmatprep.subr.mxu0 0.0
        %429 = vmatpush1.msra.mxu0 %v408
        %430 = vmatprep.subr.mxu0 0.0
        %431 = vmatpush1.msra.mxu0 %v409
        %432 = vmatprep.subr.mxu0 0.0
        %433 = vmatpush1.msra.mxu0 %v410
        %434 = vmatprep.subr.mxu0 0.0
        %435 = vmatpush1.msra.mxu0 %v411
        %436 = vmatprep.subr.mxu0 0.0
        %437 = vmatpush1.msra.mxu0 %v412
        %438 = vmatprep.subr.mxu0 0.0
        %439 = vmatpush1.msra.mxu0 %v413
        %440 = vmatprep.subr.mxu0 0.0
        %441 = vmatpush1.msra.mxu0 %v414
        %442 = vmatprep.subr.mxu0 0.0
        %443 = vmatpush1.msra.mxu0 %v415
        %444 = vmatprep.subr.mxu0 0.0
        %445 = vmatpush1.msra.mxu0 %v416
        %446 = vmatprep.subr.mxu0 0.0
        %447 = vmatpush1.msra.mxu0 %v417
        %448 = vmatprep.subr.mxu0 0.0
        %449 = vmatpush1.msra.mxu0 %v418
        %450 = vmatprep.subr.mxu0 0.0
        %451 = vmatpush1.msra.mxu0 %v419
        %452 = vmatprep.subr.mxu0 0.0
        %453 = vmatpush1.msra.mxu0 0.0
        %454 = vmatprep.subr.mxu0 0.0
        %455 = vmatpush1.msra.mxu0 0.0
        %456 = vmatprep.subr.mxu0 0.0
        %457 = vmatpush1.msra.mxu0 0.0
        %458 = vmatprep.subr.mxu0 0.0
        %459 = vmatpush1.msra.mxu0 0.0
        %460 = vmatprep.subr.mxu0 0.0
        %461 = vmatpush1.msra.mxu0 0.0
        %462 = vmatprep.subr.mxu0 0.0
        %463 = vmatpush1.msra.mxu0 0.0
        %464 = vmatprep.subr.mxu0 0.0
        %465 = vmatpush1.msra.mxu0 0.0
        %466 = vmatprep.subr.mxu0 0.0
        %467 = vmatpush1.msra.mxu0 0.0
        %468 = vmatprep.subr.mxu0 0.0
        %469 = vmatpush1.msra.mxu0 0.0
        %470 = vmatprep.subr.mxu0 0.0
        %471 = vmatpush1.msra.mxu0 0.0
        %472 = vmatprep.subr.mxu0 0.0
        %473 = vmatpush1.msra.mxu0 0.0
        %474 = vmatprep.subr.mxu0 0.0
        %475 = vmatpush1.msra.mxu0 0.0
        %476 = vmatprep.subr.mxu0 0.0
        %477 = vmatpush1.msra.mxu0 0.0
        %478 = vmatprep.subr.mxu0 0.0
        %479 = vmatpush1.msra.mxu0 0.0
        %480 = vmatprep.subr.mxu0 0.0
        %481 = vmatpush1.msra.mxu0 0.0
        %482 = vmatprep.subr.mxu0 0.0
        %483 = vmatpush1.msra.mxu0 0.0
        %484 = vmatprep.mubr.f32.mxu0 0.0
        %485 = vmatmul.mubr.f32.gmra.mrb[0].mxu0 %v401
        %v486 = vpop.f32.mrb[0].mxu0
        %v487 = vadd.f32 0.0, %v486
        %v488 = vpop.f32.mrb[0].mxu0
        %489 = vmatprep.mubr.f32.mxu0 0.0
        %490 = vmatmul.mubr.f32.gmra.mrb[0].mxu0 %v402
        %v491 = vpop.f32.mrb[0].mxu0
        %v492 = vadd.f32 0.0, %v491
        %v493 = vpop.f32.mrb[0].mxu0
        %494 = vdwg.mxu0
        %v495 = vadd.f32 %v391, %v487
        %v496 = vadd.f32 %v396, %v492
        %v497 = vld [vmem:[%s2] sm:$0x1]
        %v499 = vlaneseq
        %v500 = vshrl.u32 %v499, 7
        %v501 = vsub.s32 0, %v500
        %v502 = vrot.slane %v497, %v501
        %v504 = vadd.f32 %v495, %v502
        %v505 = vadd.f32 %v496, %v502
        %506 = vst [vmem:[%s201] sm:$0xff] %v504
        %507 = vst [vmem:[%s201 + $0x8] sm:$0xff] %v505
        %s508 = sand.u32 %s117, 1
        %s509 = scalar_lea.sflag [#allocation4], %s508
        %s510 = sand.u32 %s117, 1
        %s511 = smul.addr %s510, 16
        %s512 = scalar_lea.vmem [#allocation5], %s511
        // Predicated region
        $region37: #{tpu_custom_call.1} parent=31 // pred_check
          %p513 = pneg %p127
        $region38: #{tpu_custom_call.1} parent=31 // pred_check_branch
          %515 = sbr.rel (%p513) target = $region40
        $region39: #{tpu_custom_call.1} parent=31 // pred_region
          %s516 = smul.u32 2, %s24
          %s518 = ssub.s32 256, 256
          %519 = vsyncadd %s509, %s518
          %s520 = sadd.s32 %s25, %s516
          %s521 = smul.addr %s23, 2
          %s522 = sadd.s32 %s520, %s521
          %s523 = smul.addr %s522, 128
          %s524 = scalar_lea.hbm %s3, %s523
          %s525 = sshll.u32 %s512, 4
          %s526 = int_to_ptr.vmem [resolvable:$true] %s525
          %531 = dma.vmem_to_hbm [thread:$0]  %s526, 256, %s524, %s509, 128, 128, 8
        $region40: #{tpu_custom_call.1} parent=31 // pred_fallthru
          _
      $region32: #{tpu_custom_call.1} parent=5 // pred_fallthru
        _
      %p532 = scmp.le.s32.totalorder 2, %s13
      // Predicated region
      $region41: #{tpu_custom_call.1} parent=5 // pred_check
        %p533 = pneg %p532
      $region42: #{tpu_custom_call.1} parent=5 // pred_check_branch
        %535 = sbr.rel (%p533) target = $region44
      $region43: #{tpu_custom_call.1} parent=5 // pred_region
        %s536 = ssub.s32 %s13, 2
        // Predicated region
        $region45: #{tpu_custom_call.1} parent=43 // pred_check
          %p537 = pneg %p133
        $region46: #{tpu_custom_call.1} parent=43 // pred_check_branch
          %539 = sbr.rel (%p537) target = $region48
        $region47: #{tpu_custom_call.1} parent=43 // pred_region
          %s540 = sand.u32 %s118, 1
          %s541 = scalar_lea.sflag [#allocation4], %s540
          %s542 = sand.u32 %s118, 1
          %s543 = smul.addr %s542, 16
          %s544 = scalar_lea.vmem [#allocation5], %s543
          %545 = dma.done %s541, 256
        $region48: #{tpu_custom_call.1} parent=43 // pred_fallthru
          _
      $region44: #{tpu_custom_call.1} parent=5 // pred_fallthru
        _
    $region6: #{tpu_custom_call.1} parent=1 // loop_footer
      %s17 = sadd.s32 1, %s13
    $region7: #{tpu_custom_call.1} parent=1 // loop_footer_branch
      %12 = sbr.rel target = $region3
    $region8: #{tpu_custom_call.1} parent=1 // loop_exit
      _
    %546 = vsyncpa [#allocation3], 1
    %s547 = scalar_lea.sflag [#allocation3], 1
    %548 = vsyncpa %s547, 1
    %549 = vsyncpa [#allocation4], 1
    %s550 = scalar_lea.sflag [#allocation4], 1
    %551 = vsyncpa %s550, 1

</llo_original>
